<compile_context>
chip_gen: v7x
topology: tpu7x:2x2x1
jax: 0.10.0
libtpu: 0.0.40
codegen_flags: <defaults>
</compile_context>

<pallas_src>
import jax
import jax.numpy as jnp
from jax.experimental import pallas as pl
from jax.experimental.pallas import tpu as pltpu


def _pos_embed_kernel(ids_ref, word_hbm, pos_ref, out_ref, wbuf, copy_sems):
    # ids_ref  : (B*L,) int32 in SMEM (scalar prefetch)
    # word_hbm : (n_emb, dim) ref left in HBM (pl.ANY) -- manual DMA gather
    # pos_ref  : (L, dim) positional rows 0..L-1 (VMEM block)
    # out_ref  : (1, L, dim) output block for batch row b = program_id(0)
    # wbuf     : (L, dim) VMEM scratch holding the gathered word rows
    # copy_sems: (L,) DMA semaphores, one per in-flight row copy
    b = pl.program_id(0)
    L, dim = wbuf.shape

    # Issue all L row-gather DMAs (HBM -> VMEM); they stay in flight together.
    for r in range(L):                      # L is static; unrolled at trace time
        tok = ids_ref[b * L + r]            # scalar-path read from SMEM
        pltpu.make_async_copy(
            word_hbm.at[pl.ds(tok, 1), :],  # one (1, dim) row of the table
            wbuf.at[pl.ds(r, 1), :],
            copy_sems.at[r],
        ).start()

    # Wait for all row copies to land.
    for r in range(L):
        pltpu.make_async_copy(
            word_hbm.at[pl.ds(0, 1), :],    # same copy shape; only sizes matter
            wbuf.at[pl.ds(r, 1), :],
            copy_sems.at[r],
        ).wait()

    # word_emb + pos_emb ; dropout == identity in eval mode.
    out_ref[0] = (wbuf[...] + pos_ref[...]).astype(out_ref.dtype)


def position_embedding(x_ids, word_table, pos_table):
    """x_ids: (B, L) int token ids -> (B, L, dim) embeddings (eval mode)."""
    B, L = x_ids.shape
    n_emb, dim = word_table.shape
    max_len, _ = pos_table.shape
    assert L <= max_len, "sequence length exceeds max_len"

    ids_flat = x_ids.reshape(B * L).astype(jnp.int32)
    pos_rows = pos_table[:L]                # rows 0..L-1 (tiny wrapper-side slice)

    itemsize = jnp.dtype(word_table.dtype).itemsize
    return pl.pallas_call(
        _pos_embed_kernel,
        out_shape=jax.ShapeDtypeStruct((B, L, dim), word_table.dtype),
        grid_spec=pltpu.PrefetchScalarGridSpec(
            num_scalar_prefetch=1,          # ids_flat lands in SMEM
            grid=(B,),
            in_specs=[
                pl.BlockSpec(memory_space=pl.ANY),              # word table stays in HBM
                pl.BlockSpec((L, dim), lambda b, ids: (0, 0)),  # pos rows (full slab)
            ],
            out_specs=pl.BlockSpec((1, L, dim), lambda b, ids: (b, 0, 0)),
            scratch_shapes=[
                pltpu.VMEM((L, dim), word_table.dtype),
                pltpu.SemaphoreType.DMA((L,)),
            ],
        ),
        compiler_params=pltpu.CompilerParams(
            dimension_semantics=("parallel",)),
        cost_estimate=pl.CostEstimate(
            flops=B * L * dim,                       # the add
            transcendentals=0,
            bytes_accessed=(B * L * 4                # ids
                            + B * L * dim * itemsize     # gathered word rows
                            + L * dim * itemsize         # pos rows
                            + B * L * dim * itemsize)),  # output writeback
    )(ids_flat, word_table, pos_rows)


if __name__ == "__main__":
    key = jax.random.PRNGKey(0)
    k_word, k_pos, k_ids = jax.random.split(key, 3)

    # small shapes consistent with the module: batch=2, seq=8, vocab=64,
    # dim=128 (lane-dense), max_len=16
    B, L = 2, 8
    n_emb, dim, max_len = 64, 128, 16

    # nn.Embedding default init is N(0, 1)
    word_table = jax.random.normal(k_word, (n_emb, dim), dtype=jnp.float32)
    pos_table = jax.random.normal(k_pos, (max_len, dim), dtype=jnp.float32)
    x = jax.random.randint(k_ids, (B, L), 0, n_emb, dtype=jnp.int32)

    out = position_embedding(x, word_table, pos_table)
    out = jax.block_until_ready(out)

    # plain-JAX reference (dropout in eval mode == identity)
    ref = word_table[x] + pos_table[jnp.arange(L)][None, :, :]

    assert out.shape == (B, L, dim)
    assert out.dtype == jnp.float32
    assert jnp.allclose(out, ref, atol=1e-5), "kernel output mismatch vs reference"

    print("KERNEL_OK")
</pallas_src>

<mosaic_0001>
module attributes {stable_mosaic.version = 11 : i64} {
  func.func @_pos_embed_kernel(%arg0: i32, %arg1: memref<16xi32, #tpu.memory_space<smem>>, %arg2: memref<64x128xf32, #tpu.memory_space<any>>, %arg3: memref<8x128xf32, #tpu.memory_space<vmem>>, %arg4: memref<1x8x128xf32, #tpu.memory_space<vmem>>, %arg5: memref<8x128xf32, #tpu.memory_space<vmem>>, %arg6: memref<8x!tpu.dma_semaphore, #tpu.memory_space<semaphore_mem>>) attributes {dimension_semantics = [#tpu.dimension_semantics<parallel>], iteration_bounds = array<i64: 2>, scalar_prefetch = 1 : i64, scratch_operands = 2 : i64, tpu.core_type = #tpu.core_type<tc>, window_params = [{}, {pipeline_mode = #tpu.pipeline_mode<synchronous>, transform_indices = @transform_1, window_bounds = array<i64: 8, 128>}, {transform_indices = @transform_2, window_bounds = array<i64: 1, 8, 128>}]} {
    %c8_i32 = arith.constant 8 : i32
    %0 = arith.muli %arg0, %c8_i32 : i32
    %c0_i32 = arith.constant 0 : i32
    %1 = arith.addi %0, %c0_i32 : i32
    %2 = arith.index_cast %1 : i32 to index
    %3 = memref.load %arg1[%2] : memref<16xi32, #tpu.memory_space<smem>>
    %c0_i32_0 = arith.constant 0 : i32
    %c0_i32_1 = arith.constant 0 : i32
    %4 = tpu.memref_slice %arg2[%3, %c0_i32_1] : memref<64x128xf32, #tpu.memory_space<any>> -> memref<1x128xf32, #tpu.memory_space<any>>
    %c0_i32_2 = arith.constant 0 : i32
    %c0_i32_3 = arith.constant 0 : i32
    %5 = tpu.memref_slice %arg5[%c0_i32_2, %c0_i32_3] : memref<8x128xf32, #tpu.memory_space<vmem>> -> memref<1x128xf32, #tpu.memory_space<vmem>>
    %6 = tpu.memref_slice %arg6[%c0_i32_0] : memref<8x!tpu.dma_semaphore, #tpu.memory_space<semaphore_mem>> -> memref<1x!tpu.dma_semaphore, #tpu.memory_space<semaphore_mem>>
    %7 = tpu.memref_squeeze %6 : memref<1x!tpu.dma_semaphore, #tpu.memory_space<semaphore_mem>> -> memref<!tpu.dma_semaphore, #tpu.memory_space<semaphore_mem>>
    tpu.enqueue_dma source(%4 : memref<1x128xf32, #tpu.memory_space<any>>) target(%5 : memref<1x128xf32, #tpu.memory_space<vmem>>) target_semaphore(%7 : memref<!tpu.dma_semaphore, #tpu.memory_space<semaphore_mem>>)
    %c8_i32_4 = arith.constant 8 : i32
    %8 = arith.muli %arg0, %c8_i32_4 : i32
    %c1_i32 = arith.constant 1 : i32
    %9 = arith.addi %8, %c1_i32 : i32
    %10 = arith.index_cast %9 : i32 to index
    %11 = memref.load %arg1[%10] : memref<16xi32, #tpu.memory_space<smem>>
    %c1_i32_5 = arith.constant 1 : i32
    %c0_i32_6 = arith.constant 0 : i32
    %12 = tpu.memref_slice %arg2[%11, %c0_i32_6] : memref<64x128xf32, #tpu.memory_space<any>> -> memref<1x128xf32, #tpu.memory_space<any>>
    %c1_i32_7 = arith.constant 1 : i32
    %c0_i32_8 = arith.constant 0 : i32
    %13 = tpu.memref_slice %arg5[%c1_i32_7, %c0_i32_8] : memref<8x128xf32, #tpu.memory_space<vmem>> -> memref<1x128xf32, #tpu.memory_space<vmem>>
    %14 = tpu.memref_slice %arg6[%c1_i32_5] : memref<8x!tpu.dma_semaphore, #tpu.memory_space<semaphore_mem>> -> memref<1x!tpu.dma_semaphore, #tpu.memory_space<semaphore_mem>>
    %15 = tpu.memref_squeeze %14 : memref<1x!tpu.dma_semaphore, #tpu.memory_space<semaphore_mem>> -> memref<!tpu.dma_semaphore, #tpu.memory_space<semaphore_mem>>
    tpu.enqueue_dma source(%12 : memref<1x128xf32, #tpu.memory_space<any>>) target(%13 : memref<1x128xf32, #tpu.memory_space<vmem>>) target_semaphore(%15 : memref<!tpu.dma_semaphore, #tpu.memory_space<semaphore_mem>>)
    %c8_i32_9 = arith.constant 8 : i32
    %16 = arith.muli %arg0, %c8_i32_9 : i32
    %c2_i32 = arith.constant 2 : i32
    %17 = arith.addi %16, %c2_i32 : i32
    %18 = arith.index_cast %17 : i32 to index
    %19 = memref.load %arg1[%18] : memref<16xi32, #tpu.memory_space<smem>>
    %c2_i32_10 = arith.constant 2 : i32
    %c0_i32_11 = arith.constant 0 : i32
    %20 = tpu.memref_slice %arg2[%19, %c0_i32_11] : memref<64x128xf32, #tpu.memory_space<any>> -> memref<1x128xf32, #tpu.memory_space<any>>
    %c2_i32_12 = arith.constant 2 : i32
    %c0_i32_13 = arith.constant 0 : i32
    %21 = tpu.memref_slice %arg5[%c2_i32_12, %c0_i32_13] : memref<8x128xf32, #tpu.memory_space<vmem>> -> memref<1x128xf32, #tpu.memory_space<vmem>>
    %22 = tpu.memref_slice %arg6[%c2_i32_10] : memref<8x!tpu.dma_semaphore, #tpu.memory_space<semaphore_mem>> -> memref<1x!tpu.dma_semaphore, #tpu.memory_space<semaphore_mem>>
    %23 = tpu.memref_squeeze %22 : memref<1x!tpu.dma_semaphore, #tpu.memory_space<semaphore_mem>> -> memref<!tpu.dma_semaphore, #tpu.memory_space<semaphore_mem>>
    tpu.enqueue_dma source(%20 : memref<1x128xf32, #tpu.memory_space<any>>) target(%21 : memref<1x128xf32, #tpu.memory_space<vmem>>) target_semaphore(%23 : memref<!tpu.dma_semaphore, #tpu.memory_space<semaphore_mem>>)
    %c8_i32_14 = arith.constant 8 : i32
    %24 = arith.muli %arg0, %c8_i32_14 : i32
    %c3_i32 = arith.constant 3 : i32
    %25 = arith.addi %24, %c3_i32 : i32
    %26 = arith.index_cast %25 : i32 to index
    %27 = memref.load %arg1[%26] : memref<16xi32, #tpu.memory_space<smem>>
    %c3_i32_15 = arith.constant 3 : i32
    %c0_i32_16 = arith.constant 0 : i32
    %28 = tpu.memref_slice %arg2[%27, %c0_i32_16] : memref<64x128xf32, #tpu.memory_space<any>> -> memref<1x128xf32, #tpu.memory_space<any>>
    %c3_i32_17 = arith.constant 3 : i32
    %c0_i32_18 = arith.constant 0 : i32
    %29 = tpu.memref_slice %arg5[%c3_i32_17, %c0_i32_18] : memref<8x128xf32, #tpu.memory_space<vmem>> -> memref<1x128xf32, #tpu.memory_space<vmem>>
    %30 = tpu.memref_slice %arg6[%c3_i32_15] : memref<8x!tpu.dma_semaphore, #tpu.memory_space<semaphore_mem>> -> memref<1x!tpu.dma_semaphore, #tpu.memory_space<semaphore_mem>>
    %31 = tpu.memref_squeeze %30 : memref<1x!tpu.dma_semaphore, #tpu.memory_space<semaphore_mem>> -> memref<!tpu.dma_semaphore, #tpu.memory_space<semaphore_mem>>
    tpu.enqueue_dma source(%28 : memref<1x128xf32, #tpu.memory_space<any>>) target(%29 : memref<1x128xf32, #tpu.memory_space<vmem>>) target_semaphore(%31 : memref<!tpu.dma_semaphore, #tpu.memory_space<semaphore_mem>>)
    %c8_i32_19 = arith.constant 8 : i32
    %32 = arith.muli %arg0, %c8_i32_19 : i32
    %c4_i32 = arith.constant 4 : i32
    %33 = arith.addi %32, %c4_i32 : i32
    %34 = arith.index_cast %33 : i32 to index
    %35 = memref.load %arg1[%34] : memref<16xi32, #tpu.memory_space<smem>>
    %c4_i32_20 = arith.constant 4 : i32
    %c0_i32_21 = arith.constant 0 : i32
    %36 = tpu.memref_slice %arg2[%35, %c0_i32_21] : memref<64x128xf32, #tpu.memory_space<any>> -> memref<1x128xf32, #tpu.memory_space<any>>
    %c4_i32_22 = arith.constant 4 : i32
    %c0_i32_23 = arith.constant 0 : i32
    %37 = tpu.memref_slice %arg5[%c4_i32_22, %c0_i32_23] : memref<8x128xf32, #tpu.memory_space<vmem>> -> memref<1x128xf32, #tpu.memory_space<vmem>>
    %38 = tpu.memref_slice %arg6[%c4_i32_20] : memref<8x!tpu.dma_semaphore, #tpu.memory_space<semaphore_mem>> -> memref<1x!tpu.dma_semaphore, #tpu.memory_space<semaphore_mem>>
    %39 = tpu.memref_squeeze %38 : memref<1x!tpu.dma_semaphore, #tpu.memory_space<semaphore_mem>> -> memref<!tpu.dma_semaphore, #tpu.memory_space<semaphore_mem>>
    tpu.enqueue_dma source(%36 : memref<1x128xf32, #tpu.memory_space<any>>) target(%37 : memref<1x128xf32, #tpu.memory_space<vmem>>) target_semaphore(%39 : memref<!tpu.dma_semaphore, #tpu.memory_space<semaphore_mem>>)
    %c8_i32_24 = arith.constant 8 : i32
    %40 = arith.muli %arg0, %c8_i32_24 : i32
    %c5_i32 = arith.constant 5 : i32
    %41 = arith.addi %40, %c5_i32 : i32
    %42 = arith.index_cast %41 : i32 to index
    %43 = memref.load %arg1[%42] : memref<16xi32, #tpu.memory_space<smem>>
    %c5_i32_25 = arith.constant 5 : i32
    %c0_i32_26 = arith.constant 0 : i32
    %44 = tpu.memref_slice %arg2[%43, %c0_i32_26] : memref<64x128xf32, #tpu.memory_space<any>> -> memref<1x128xf32, #tpu.memory_space<any>>
    %c5_i32_27 = arith.constant 5 : i32
    %c0_i32_28 = arith.constant 0 : i32
    %45 = tpu.memref_slice %arg5[%c5_i32_27, %c0_i32_28] : memref<8x128xf32, #tpu.memory_space<vmem>> -> memref<1x128xf32, #tpu.memory_space<vmem>>
    %46 = tpu.memref_slice %arg6[%c5_i32_25] : memref<8x!tpu.dma_semaphore, #tpu.memory_space<semaphore_mem>> -> memref<1x!tpu.dma_semaphore, #tpu.memory_space<semaphore_mem>>
    %47 = tpu.memref_squeeze %46 : memref<1x!tpu.dma_semaphore, #tpu.memory_space<semaphore_mem>> -> memref<!tpu.dma_semaphore, #tpu.memory_space<semaphore_mem>>
    tpu.enqueue_dma source(%44 : memref<1x128xf32, #tpu.memory_space<any>>) target(%45 : memref<1x128xf32, #tpu.memory_space<vmem>>) target_semaphore(%47 : memref<!tpu.dma_semaphore, #tpu.memory_space<semaphore_mem>>)
    %c8_i32_29 = arith.constant 8 : i32
    %48 = arith.muli %arg0, %c8_i32_29 : i32
    %c6_i32 = arith.constant 6 : i32
    %49 = arith.addi %48, %c6_i32 : i32
    %50 = arith.index_cast %49 : i32 to index
    %51 = memref.load %arg1[%50] : memref<16xi32, #tpu.memory_space<smem>>
    %c6_i32_30 = arith.constant 6 : i32
    %c0_i32_31 = arith.constant 0 : i32
    %52 = tpu.memref_slice %arg2[%51, %c0_i32_31] : memref<64x128xf32, #tpu.memory_space<any>> -> memref<1x128xf32, #tpu.memory_space<any>>
    %c6_i32_32 = arith.constant 6 : i32
    %c0_i32_33 = arith.constant 0 : i32
    %53 = tpu.memref_slice %arg5[%c6_i32_32, %c0_i32_33] : memref<8x128xf32, #tpu.memory_space<vmem>> -> memref<1x128xf32, #tpu.memory_space<vmem>>
    %54 = tpu.memref_slice %arg6[%c6_i32_30] : memref<8x!tpu.dma_semaphore, #tpu.memory_space<semaphore_mem>> -> memref<1x!tpu.dma_semaphore, #tpu.memory_space<semaphore_mem>>
    %55 = tpu.memref_squeeze %54 : memref<1x!tpu.dma_semaphore, #tpu.memory_space<semaphore_mem>> -> memref<!tpu.dma_semaphore, #tpu.memory_space<semaphore_mem>>
    tpu.enqueue_dma source(%52 : memref<1x128xf32, #tpu.memory_space<any>>) target(%53 : memref<1x128xf32, #tpu.memory_space<vmem>>) target_semaphore(%55 : memref<!tpu.dma_semaphore, #tpu.memory_space<semaphore_mem>>)
    %c8_i32_34 = arith.constant 8 : i32
    %56 = arith.muli %arg0, %c8_i32_34 : i32
    %c7_i32 = arith.constant 7 : i32
    %57 = arith.addi %56, %c7_i32 : i32
    %58 = arith.index_cast %57 : i32 to index
    %59 = memref.load %arg1[%58] : memref<16xi32, #tpu.memory_space<smem>>
    %c7_i32_35 = arith.constant 7 : i32
    %c0_i32_36 = arith.constant 0 : i32
    %60 = tpu.memref_slice %arg2[%59, %c0_i32_36] : memref<64x128xf32, #tpu.memory_space<any>> -> memref<1x128xf32, #tpu.memory_space<any>>
    %c7_i32_37 = arith.constant 7 : i32
    %c0_i32_38 = arith.constant 0 : i32
    %61 = tpu.memref_slice %arg5[%c7_i32_37, %c0_i32_38] : memref<8x128xf32, #tpu.memory_space<vmem>> -> memref<1x128xf32, #tpu.memory_space<vmem>>
    %62 = tpu.memref_slice %arg6[%c7_i32_35] : memref<8x!tpu.dma_semaphore, #tpu.memory_space<semaphore_mem>> -> memref<1x!tpu.dma_semaphore, #tpu.memory_space<semaphore_mem>>
    %63 = tpu.memref_squeeze %62 : memref<1x!tpu.dma_semaphore, #tpu.memory_space<semaphore_mem>> -> memref<!tpu.dma_semaphore, #tpu.memory_space<semaphore_mem>>
    tpu.enqueue_dma source(%60 : memref<1x128xf32, #tpu.memory_space<any>>) target(%61 : memref<1x128xf32, #tpu.memory_space<vmem>>) target_semaphore(%63 : memref<!tpu.dma_semaphore, #tpu.memory_space<semaphore_mem>>)
    %c0_i32_39 = arith.constant 0 : i32
    %c0_i32_40 = arith.constant 0 : i32
    %c0_i32_41 = arith.constant 0 : i32
    %64 = tpu.memref_slice %arg2[%c0_i32_40, %c0_i32_41] : memref<64x128xf32, #tpu.memory_space<any>> -> memref<1x128xf32, #tpu.memory_space<any>>
    %c0_i32_42 = arith.constant 0 : i32
    %c0_i32_43 = arith.constant 0 : i32
    %65 = tpu.memref_slice %arg5[%c0_i32_42, %c0_i32_43] : memref<8x128xf32, #tpu.memory_space<vmem>> -> memref<1x128xf32, #tpu.memory_space<vmem>>
    %66 = tpu.memref_slice %arg6[%c0_i32_39] : memref<8x!tpu.dma_semaphore, #tpu.memory_space<semaphore_mem>> -> memref<1x!tpu.dma_semaphore, #tpu.memory_space<semaphore_mem>>
    %67 = tpu.memref_squeeze %66 : memref<1x!tpu.dma_semaphore, #tpu.memory_space<semaphore_mem>> -> memref<!tpu.dma_semaphore, #tpu.memory_space<semaphore_mem>>
    tpu.wait_dma2 semaphore(%67 : memref<!tpu.dma_semaphore, #tpu.memory_space<semaphore_mem>>) src(%64 : memref<1x128xf32, #tpu.memory_space<any>>) dst(%65 : memref<1x128xf32, #tpu.memory_space<vmem>>)
    %c1_i32_44 = arith.constant 1 : i32
    %c0_i32_45 = arith.constant 0 : i32
    %c0_i32_46 = arith.constant 0 : i32
    %68 = tpu.memref_slice %arg2[%c0_i32_45, %c0_i32_46] : memref<64x128xf32, #tpu.memory_space<any>> -> memref<1x128xf32, #tpu.memory_space<any>>
    %c1_i32_47 = arith.constant 1 : i32
    %c0_i32_48 = arith.constant 0 : i32
    %69 = tpu.memref_slice %arg5[%c1_i32_47, %c0_i32_48] : memref<8x128xf32, #tpu.memory_space<vmem>> -> memref<1x128xf32, #tpu.memory_space<vmem>>
    %70 = tpu.memref_slice %arg6[%c1_i32_44] : memref<8x!tpu.dma_semaphore, #tpu.memory_space<semaphore_mem>> -> memref<1x!tpu.dma_semaphore, #tpu.memory_space<semaphore_mem>>
    %71 = tpu.memref_squeeze %70 : memref<1x!tpu.dma_semaphore, #tpu.memory_space<semaphore_mem>> -> memref<!tpu.dma_semaphore, #tpu.memory_space<semaphore_mem>>
    tpu.wait_dma2 semaphore(%71 : memref<!tpu.dma_semaphore, #tpu.memory_space<semaphore_mem>>) src(%68 : memref<1x128xf32, #tpu.memory_space<any>>) dst(%69 : memref<1x128xf32, #tpu.memory_space<vmem>>)
    %c2_i32_49 = arith.constant 2 : i32
    %c0_i32_50 = arith.constant 0 : i32
    %c0_i32_51 = arith.constant 0 : i32
    %72 = tpu.memref_slice %arg2[%c0_i32_50, %c0_i32_51] : memref<64x128xf32, #tpu.memory_space<any>> -> memref<1x128xf32, #tpu.memory_space<any>>
    %c2_i32_52 = arith.constant 2 : i32
    %c0_i32_53 = arith.constant 0 : i32
    %73 = tpu.memref_slice %arg5[%c2_i32_52, %c0_i32_53] : memref<8x128xf32, #tpu.memory_space<vmem>> -> memref<1x128xf32, #tpu.memory_space<vmem>>
    %74 = tpu.memref_slice %arg6[%c2_i32_49] : memref<8x!tpu.dma_semaphore, #tpu.memory_space<semaphore_mem>> -> memref<1x!tpu.dma_semaphore, #tpu.memory_space<semaphore_mem>>
    %75 = tpu.memref_squeeze %74 : memref<1x!tpu.dma_semaphore, #tpu.memory_space<semaphore_mem>> -> memref<!tpu.dma_semaphore, #tpu.memory_space<semaphore_mem>>
    tpu.wait_dma2 semaphore(%75 : memref<!tpu.dma_semaphore, #tpu.memory_space<semaphore_mem>>) src(%72 : memref<1x128xf32, #tpu.memory_space<any>>) dst(%73 : memref<1x128xf32, #tpu.memory_space<vmem>>)
    %c3_i32_54 = arith.constant 3 : i32
    %c0_i32_55 = arith.constant 0 : i32
    %c0_i32_56 = arith.constant 0 : i32
    %76 = tpu.memref_slice %arg2[%c0_i32_55, %c0_i32_56] : memref<64x128xf32, #tpu.memory_space<any>> -> memref<1x128xf32, #tpu.memory_space<any>>
    %c3_i32_57 = arith.constant 3 : i32
    %c0_i32_58 = arith.constant 0 : i32
    %77 = tpu.memref_slice %arg5[%c3_i32_57, %c0_i32_58] : memref<8x128xf32, #tpu.memory_space<vmem>> -> memref<1x128xf32, #tpu.memory_space<vmem>>
    %78 = tpu.memref_slice %arg6[%c3_i32_54] : memref<8x!tpu.dma_semaphore, #tpu.memory_space<semaphore_mem>> -> memref<1x!tpu.dma_semaphore, #tpu.memory_space<semaphore_mem>>
    %79 = tpu.memref_squeeze %78 : memref<1x!tpu.dma_semaphore, #tpu.memory_space<semaphore_mem>> -> memref<!tpu.dma_semaphore, #tpu.memory_space<semaphore_mem>>
    tpu.wait_dma2 semaphore(%79 : memref<!tpu.dma_semaphore, #tpu.memory_space<semaphore_mem>>) src(%76 : memref<1x128xf32, #tpu.memory_space<any>>) dst(%77 : memref<1x128xf32, #tpu.memory_space<vmem>>)
    %c4_i32_59 = arith.constant 4 : i32
    %c0_i32_60 = arith.constant 0 : i32
    %c0_i32_61 = arith.constant 0 : i32
    %80 = tpu.memref_slice %arg2[%c0_i32_60, %c0_i32_61] : memref<64x128xf32, #tpu.memory_space<any>> -> memref<1x128xf32, #tpu.memory_space<any>>
    %c4_i32_62 = arith.constant 4 : i32
    %c0_i32_63 = arith.constant 0 : i32
    %81 = tpu.memref_slice %arg5[%c4_i32_62, %c0_i32_63] : memref<8x128xf32, #tpu.memory_space<vmem>> -> memref<1x128xf32, #tpu.memory_space<vmem>>
    %82 = tpu.memref_slice %arg6[%c4_i32_59] : memref<8x!tpu.dma_semaphore, #tpu.memory_space<semaphore_mem>> -> memref<1x!tpu.dma_semaphore, #tpu.memory_space<semaphore_mem>>
    %83 = tpu.memref_squeeze %82 : memref<1x!tpu.dma_semaphore, #tpu.memory_space<semaphore_mem>> -> memref<!tpu.dma_semaphore, #tpu.memory_space<semaphore_mem>>
    tpu.wait_dma2 semaphore(%83 : memref<!tpu.dma_semaphore, #tpu.memory_space<semaphore_mem>>) src(%80 : memref<1x128xf32, #tpu.memory_space<any>>) dst(%81 : memref<1x128xf32, #tpu.memory_space<vmem>>)
    %c5_i32_64 = arith.constant 5 : i32
    %c0_i32_65 = arith.constant 0 : i32
    %c0_i32_66 = arith.constant 0 : i32
    %84 = tpu.memref_slice %arg2[%c0_i32_65, %c0_i32_66] : memref<64x128xf32, #tpu.memory_space<any>> -> memref<1x128xf32, #tpu.memory_space<any>>
    %c5_i32_67 = arith.constant 5 : i32
    %c0_i32_68 = arith.constant 0 : i32
    %85 = tpu.memref_slice %arg5[%c5_i32_67, %c0_i32_68] : memref<8x128xf32, #tpu.memory_space<vmem>> -> memref<1x128xf32, #tpu.memory_space<vmem>>
    %86 = tpu.memref_slice %arg6[%c5_i32_64] : memref<8x!tpu.dma_semaphore, #tpu.memory_space<semaphore_mem>> -> memref<1x!tpu.dma_semaphore, #tpu.memory_space<semaphore_mem>>
    %87 = tpu.memref_squeeze %86 : memref<1x!tpu.dma_semaphore, #tpu.memory_space<semaphore_mem>> -> memref<!tpu.dma_semaphore, #tpu.memory_space<semaphore_mem>>
    tpu.wait_dma2 semaphore(%87 : memref<!tpu.dma_semaphore, #tpu.memory_space<semaphore_mem>>) src(%84 : memref<1x128xf32, #tpu.memory_space<any>>) dst(%85 : memref<1x128xf32, #tpu.memory_space<vmem>>)
    %c6_i32_69 = arith.constant 6 : i32
    %c0_i32_70 = arith.constant 0 : i32
    %c0_i32_71 = arith.constant 0 : i32
    %88 = tpu.memref_slice %arg2[%c0_i32_70, %c0_i32_71] : memref<64x128xf32, #tpu.memory_space<any>> -> memref<1x128xf32, #tpu.memory_space<any>>
    %c6_i32_72 = arith.constant 6 : i32
    %c0_i32_73 = arith.constant 0 : i32
    %89 = tpu.memref_slice %arg5[%c6_i32_72, %c0_i32_73] : memref<8x128xf32, #tpu.memory_space<vmem>> -> memref<1x128xf32, #tpu.memory_space<vmem>>
    %90 = tpu.memref_slice %arg6[%c6_i32_69] : memref<8x!tpu.dma_semaphore, #tpu.memory_space<semaphore_mem>> -> memref<1x!tpu.dma_semaphore, #tpu.memory_space<semaphore_mem>>
    %91 = tpu.memref_squeeze %90 : memref<1x!tpu.dma_semaphore, #tpu.memory_space<semaphore_mem>> -> memref<!tpu.dma_semaphore, #tpu.memory_space<semaphore_mem>>
    tpu.wait_dma2 semaphore(%91 : memref<!tpu.dma_semaphore, #tpu.memory_space<semaphore_mem>>) src(%88 : memref<1x128xf32, #tpu.memory_space<any>>) dst(%89 : memref<1x128xf32, #tpu.memory_space<vmem>>)
    %c7_i32_74 = arith.constant 7 : i32
    %c0_i32_75 = arith.constant 0 : i32
    %c0_i32_76 = arith.constant 0 : i32
    %92 = tpu.memref_slice %arg2[%c0_i32_75, %c0_i32_76] : memref<64x128xf32, #tpu.memory_space<any>> -> memref<1x128xf32, #tpu.memory_space<any>>
    %c7_i32_77 = arith.constant 7 : i32
    %c0_i32_78 = arith.constant 0 : i32
    %93 = tpu.memref_slice %arg5[%c7_i32_77, %c0_i32_78] : memref<8x128xf32, #tpu.memory_space<vmem>> -> memref<1x128xf32, #tpu.memory_space<vmem>>
    %94 = tpu.memref_slice %arg6[%c7_i32_74] : memref<8x!tpu.dma_semaphore, #tpu.memory_space<semaphore_mem>> -> memref<1x!tpu.dma_semaphore, #tpu.memory_space<semaphore_mem>>
    %95 = tpu.memref_squeeze %94 : memref<1x!tpu.dma_semaphore, #tpu.memory_space<semaphore_mem>> -> memref<!tpu.dma_semaphore, #tpu.memory_space<semaphore_mem>>
    tpu.wait_dma2 semaphore(%95 : memref<!tpu.dma_semaphore, #tpu.memory_space<semaphore_mem>>) src(%92 : memref<1x128xf32, #tpu.memory_space<any>>) dst(%93 : memref<1x128xf32, #tpu.memory_space<vmem>>)
    %c0 = arith.constant 0 : index
    %c0_79 = arith.constant 0 : index
    %96 = vector.load %arg5[%c0, %c0_79] : memref<8x128xf32, #tpu.memory_space<vmem>>, vector<8x128xf32>
    %c0_80 = arith.constant 0 : index
    %c0_81 = arith.constant 0 : index
    %97 = vector.load %arg3[%c0_80, %c0_81] : memref<8x128xf32, #tpu.memory_space<vmem>>, vector<8x128xf32>
    %98 = arith.addf %96, %97 : vector<8x128xf32>
    %c0_82 = arith.constant 0 : index
    %c0_83 = arith.constant 0 : index
    %c0_84 = arith.constant 0 : index
    %99 = vector.load %arg4[%c0_82, %c0_83, %c0_84] : memref<1x8x128xf32, #tpu.memory_space<vmem>>, vector<1x8x128xf32>
    %100 = vector.shape_cast %99 : vector<1x8x128xf32> to vector<8x128xf32>
    %101 = vector.shape_cast %98 : vector<8x128xf32> to vector<1x8x128xf32>
    tpu.vector_store %arg4[%c0_82, %c0_83, %c0_84], %101 {strides = array<i32>} : memref<1x8x128xf32, #tpu.memory_space<vmem>>, vector<1x8x128xf32>,
    return
  }
  func.func @transform_1(%arg0: i32, %arg1: memref<16xi32, #tpu.memory_space<smem>>) -> (i32, i32) {
    %c0_i32 = arith.constant 0 : i32
    %c0_i32_0 = arith.constant 0 : i32
    %c0_i32_1 = arith.constant 0 : i32
    return %c0_i32, %c0_i32_0 : i32, i32
  }
  func.func @transform_2(%arg0: i32, %arg1: memref<16xi32, #tpu.memory_space<smem>>) -> (i32, i32, i32) {
    %c0_i32 = arith.constant 0 : i32
    %c0_i32_0 = arith.constant 0 : i32
    %c0_i32_1 = arith.constant 0 : i32
    return %arg0, %c0_i32, %c0_i32_0 : i32, i32, i32
  }
}

</mosaic_0001>

<llo_original>
// kernel: tpu_custom_call.1
$region0: #{tpu_custom_call.1}
  #allocation0 [shape = 'u32[]', space=smem, size = 0x4, offset = 0x4, fixed_abs, tag = 'smem constant byte address 0x4 - core index']
  #allocation1 [shape = 'u32[144,128]{1,0:T(1,128)}', space=vmem, size = 0x12000, scoped, tag = 'internal scratch']
  #allocation2 [shape = 'f32[8,128]{1,0:T(8,128)}', space=vmem, size = 0x1000, scoped, tag = 'scratch operand']
  #allocation3 [shape = 's32[8]{0}', space=sflag, size = 0x20, scoped, tag = 'scratch operand']
  #allocation4 [shape = 's32[1]{0}', space=sflag, size = 0x4, scoped, tag = 'scoped memory for tpu_custom_call.1']
  #allocation5 [shape = 'u8[512]{0}', space=smem, size = 0x200, scoped, tag = 'prefetched SMEM operand 0']
  #allocation10 [shape = 's32[]', space=sflag, size = 0x4, offset = 0, fixed_abs, tag = 'sflag constant byte address 0x0 - dummy sync flag']
  #allocation11 [shape = 's32[]', space=sflag, size = 0x4, offset = 0, fixed_abs, tag = 'sflag constant byte address 0x0 - dummy sync flag']
  #allocation12 [shape = 'u32[]', space=smem, size = 0x4, offset = 0x44, fixed_abs, tag = 'smem constant byte address 0x44 - assertion arg 0']
  #allocation13 [shape = 'u32[]', space=smem, size = 0x4, offset = 0x48, fixed_abs, tag = 'smem constant byte address 0x48 - assertion arg 1']
  #allocation14 [shape = 's32[]', space=sflag, size = 0x4, offset = 0, fixed_abs, tag = 'sflag constant byte address 0x0 - dummy sync flag']
  #allocation15 [shape = 's32[]', space=sflag, size = 0x4, offset = 0, fixed_abs, tag = 'sflag constant byte address 0x0 - dummy sync flag']
  #allocation16 [shape = 's32[]', space=sflag, size = 0x4, offset = 0, fixed_abs, tag = 'sflag constant byte address 0x0 - dummy sync flag']
  #allocation17 [shape = 's32[]', space=sflag, size = 0x4, offset = 0, fixed_abs, tag = 'sflag constant byte address 0x0 - dummy sync flag']
  #allocation18 [shape = 's32[]', space=sflag, size = 0x4, offset = 0, fixed_abs, tag = 'sflag constant byte address 0x0 - dummy sync flag']
  #allocation19 [shape = 's32[]', space=sflag, size = 0x4, offset = 0, fixed_abs, tag = 'sflag constant byte address 0x0 - dummy sync flag']
  #allocation20 [shape = 's32[]', space=sflag, size = 0x4, offset = 0, fixed_abs, tag = 'sflag constant byte address 0x0 - dummy sync flag']
  #allocation21 [shape = 's32[]', space=sflag, size = 0x4, offset = 0, fixed_abs, tag = 'sflag constant byte address 0x0 - dummy sync flag']
  #allocation22 [shape = 's32[]', space=sflag, size = 0x4, offset = 0, fixed_abs, tag = 'sflag constant byte address 0x0 - dummy sync flag']
  #allocation23 [shape = 's32[]', space=sflag, size = 0x4, offset = 0, fixed_abs, tag = 'sflag constant byte address 0x0 - dummy sync flag']
  #allocation24 [shape = 's32[]', space=sflag, size = 0x4, offset = 0, fixed_abs, tag = 'sflag constant byte address 0x0 - dummy sync flag']
  #allocation25 [shape = 's32[]', space=sflag, size = 0x4, offset = 0, fixed_abs, tag = 'sflag constant byte address 0x0 - dummy sync flag']
  #allocation26 [shape = 's32[]', space=sflag, size = 0x4, offset = 0, fixed_abs, tag = 'sflag constant byte address 0x0 - dummy sync flag']
  #allocation27 [shape = 's32[]', space=sflag, size = 0x4, offset = 0, fixed_abs, tag = 'sflag constant byte address 0x0 - dummy sync flag']
  %s0 = inlined_call_operand.hbm [shape: s32[16], index: 0, kind: input, shape index: {}]
  %s1 = inlined_call_operand.hbm [shape: f32[64,128], index: 1, kind: input, shape index: {}]
  %s2 = inlined_call_operand.hbm [shape: f32[8,128], index: 2, kind: input, shape index: {}]
  %s3 = inlined_call_operand.hbm [shape: f32[2,8,128], index: 3, kind: output, shape index: {}]
  %s4 = sld [smem:[#allocation0]]
  $region73: #{tpu_custom_call.1} parent=0
    _
  %s6 = ssub.s32 1, %s4
  %s7 = scalar_select 0, %s6, %s4
  %9 = dma.hbm_to_smem %s0, 16, [#allocation5], [#allocation4]
  %10 = dma.done [#allocation4], 16
  %11 = sfence
  $region1: #{tpu_custom_call.1} parent=0
    #allocation6 [shape = 'u8[4096]{0}', space=vmem, size = 0x1000, scoped, tag = 'input window, operand 2, single buffered']
    #allocation7 [shape = 's32[2]{0}', space=sflag, size = 0x8, scoped, tag = 'scoped memory for tpu_custom_call.1']
    #allocation8 [shape = 's32[2]{0}', space=sflag, size = 0x8, scoped, tag = 'scoped memory for tpu_custom_call.1']
    #allocation9 [shape = 'u8[8192]{0}', space=vmem, size = 0x2000, scoped, tag = 'output window, operand 0']
    %12 = vsyncpa [#allocation7], 0
    %13 = vsyncpa [#allocation8], 0
    %s14 = scalar_lea.sflag [#allocation8], 1
    %15 = vsyncpa %s14, 0
    loop: start=0, step=1, limit=4
    $region2: #{tpu_custom_call.1} parent=1 // loop_pre_header
      _
    $region3: #{tpu_custom_call.1} parent=1 // loop_header
      %s17 = sphi 0, %s21
      %p18 = scmp.ge.s32.totalorder %s17, 4
      %s25 = sphi 0, %s25
      %s27 = sphi 0, %s25
      %s28 = sphi 0, %s27
      %s42 = sphi 0, %s28
      %s48 = sphi 0, %s50
      %s51 = sphi 0, %s48
      %s52 = sphi 0, %s51
      %s68 = sphi 0, %s52
    $region4: #{tpu_custom_call.1} parent=1 // loop_header_branch
      %20 = sbr.rel (%p18) target = $region8
    $region5: #{tpu_custom_call.1} parent=1 // loop_body
      %s22 = ssub.s32 %s17, 1
      %s23 = ssub.s32 %s17, 2
      %s24 = sadd.s32 %s17, 1
      %s26 = sadd.s32 %s25, 1
      %p29 = scmp.eq.s32.totalorder %s17, 1
      %p30 = scmp.ne.s32.totalorder %s25, %s27
      %p31 = scmp.eq.s32.totalorder %s17, 0
      %p32 = por %p30, %p31
      %p33 = scmp.ne.s32.totalorder %s25, %s27
      %p34 = scmp.eq.s32.totalorder %s22, 1
      %p35 = por %p33, %p34
      %p36 = scmp.ne.s32.totalorder %s27, %s28
      %p37 = scmp.eq.s32.totalorder %s22, 0
      %p38 = por %p36, %p37
      %p39 = scmp.ne.s32.totalorder %s27, %s28
      %p40 = scmp.eq.s32.totalorder %s23, 1
      %p41 = por %p39, %p40
      %p43 = scmp.ne.s32.totalorder %s28, %s42
      %p44 = scmp.eq.s32.totalorder %s23, 0
      %p45 = por %p43, %p44
      %s46 = ssub.s32 %s17, %s24
      %p47 = scmp.eq.s32.totalorder %s46, 0
      %s49 = sadd.s32 %s48, 1
      %s50 = scalar_select %p47, %s48, %s49
      %p53 = pneg %p47
      %p54 = scmp.eq.s32.totalorder %s17, 1
      %p55 = por %p53, %p54
      %p56 = scmp.ne.s32.totalorder %s48, %s51
      %p57 = scmp.eq.s32.totalorder %s17, 0
      %p58 = por %p56, %p57
      %p59 = scmp.ne.s32.totalorder %s48, %s51
      %p60 = scmp.eq.s32.totalorder %s22, 1
      %p61 = por %p59, %p60
      %p62 = scmp.ne.s32.totalorder %s51, %s52
      %p63 = scmp.eq.s32.totalorder %s22, 0
      %p64 = por %p62, %p63
      %p65 = scmp.ne.s32.totalorder %s51, %s52
      %p66 = scmp.eq.s32.totalorder %s23, 1
      %p67 = por %p65, %p66
      %p69 = scmp.ne.s32.totalorder %s52, %s68
      %p70 = scmp.eq.s32.totalorder %s23, 0
      %p71 = por %p69, %p70
      %p72 = scmp.le.s32.totalorder 1, %s17
      %p73 = scmp.lt.s32.totalorder %s17, 3
      %p74 = pnand %p72, %p73
      %p75 = pneg %p74
      // Predicated region
      $region9: #{tpu_custom_call.1} parent=5 // pred_check
        _
      $region10: #{tpu_custom_call.1} parent=5 // pred_check_branch
        %77 = sbr.rel (%p74) target = $region12
      $region11: #{tpu_custom_call.1} parent=5 // pred_region
        %s78 = ssub.s32 %s17, 1
        // Predicated region
        $region13: #{tpu_custom_call.1} parent=11 // pred_check
          %p79 = pneg %p38
        $region14: #{tpu_custom_call.1} parent=11 // pred_check_branch
          %81 = sbr.rel (%p79) target = $region16
        $region15: #{tpu_custom_call.1} parent=11 // pred_region
          %s83 = ssub.s32 128, 128
          %84 = vsyncadd [#allocation7], %s83
          %s86 = sshll.u32 [#allocation6], 4
          %s87 = int_to_ptr.vmem [resolvable:$true] %s86
          %89 = dma.hbm_to_vmem [thread:$0]  %s2, 128, %s87, [#allocation7]
        $region16: #{tpu_custom_call.1} parent=11 // pred_fallthru
          _
      $region12: #{tpu_custom_call.1} parent=5 // pred_fallthru
        _
      %p90 = scmp.lt.s32.totalorder %s17, 2
      // Predicated region
      $region17: #{tpu_custom_call.1} parent=5 // pred_check
        %p91 = pneg %p90
      $region18: #{tpu_custom_call.1} parent=5 // pred_check_branch
        %93 = sbr.rel (%p91) target = $region20
      $region19: #{tpu_custom_call.1} parent=5 // pred_region
        _
      $region20: #{tpu_custom_call.1} parent=5 // pred_fallthru
        _
      %p94 = scmp.le.s32.totalorder 1, %s17
      %p95 = scmp.lt.s32.totalorder %s17, 3
      %p96 = pnand %p94, %p95
      %p97 = pneg %p96
      // Predicated region
      $region21: #{tpu_custom_call.1} parent=5 // pred_check
        _
      $region22: #{tpu_custom_call.1} parent=5 // pred_check_branch
        %99 = sbr.rel (%p96) target = $region24
      $region23: #{tpu_custom_call.1} parent=5 // pred_region
        %s100 = ssub.s32 %s17, 1
        // Predicated region
        $region25: #{tpu_custom_call.1} parent=23 // pred_check
          %p101 = pneg %p38
        $region26: #{tpu_custom_call.1} parent=23 // pred_check_branch
          %103 = sbr.rel (%p101) target = $region28
        $region27: #{tpu_custom_call.1} parent=23 // pred_region
          %104 = dma.done [#allocation7], 128
        $region28: #{tpu_custom_call.1} parent=23 // pred_fallthru
          _
        %p105 = pneg %p38
        %p106 = pneg %p35
        %p107 = pneg %p64
        %p108 = pneg %p61
        %s109 = sand.u32 %s51, 1
        %s110 = scalar_lea.sflag [#allocation8], %s109
        %s111 = sand.u32 %s51, 1
        %s112 = smul.addr %s111, 8
        %s113 = scalar_lea.vmem [#allocation9], %s112
        %s114 = smul.u32 %s22, 8
        %s115 = sld [smem:[#allocation5 + %s114]]
        %s116 = smul.addr %s115, 16
        %s117 = scalar_lea.hbm %s1, %s116
        // Predicated region
        $region29: #{tpu_custom_call.1} parent=23 // pred_check
          _
        $region30: #{tpu_custom_call.1} parent=23 // pred_check_branch
          %119 = sbr.rel target = $region32
        $region31: #{tpu_custom_call.1} parent=23 // pred_region
          %120 = sst [smem:[#allocation12]] [#allocation11]
          %121 = sst [smem:[#allocation13]] [#allocation10]
        $region32: #{tpu_custom_call.1} parent=23 // pred_fallthru
          _
        %123 = shalt.err (0)
        %s125 = sshll.u32 [#allocation2], 4
        %s126 = int_to_ptr.vmem [resolvable:$true] %s125
        %128 = dma.hbm_to_vmem [thread:$0]  %s117, 16, %s126, [#allocation3]
        %s129 = sadd.s32 %s114, 1
        %s130 = sld [smem:[#allocation5 + %s129]]
        %s131 = smul.addr %s130, 16
        %s132 = scalar_lea.hbm %s1, %s131
        %s133 = scalar_lea.vmem [#allocation2], 1
        %s134 = scalar_lea.sflag [#allocation3], 1
        // Predicated region
        $region33: #{tpu_custom_call.1} parent=23 // pred_check
          _
        $region34: #{tpu_custom_call.1} parent=23 // pred_check_branch
          %136 = sbr.rel target = $region36
        $region35: #{tpu_custom_call.1} parent=23 // pred_region
          %137 = sst [smem:[#allocation12]] [#allocation15]
          %138 = sst [smem:[#allocation13]] [#allocation14]
        $region36: #{tpu_custom_call.1} parent=23 // pred_fallthru
          _
        %140 = shalt.err (0)
        %s142 = sshll.u32 %s133, 4
        %s143 = int_to_ptr.vmem [resolvable:$true] %s142
        %145 = dma.hbm_to_vmem [thread:$0]  %s132, 16, %s143, %s134
        %s146 = sadd.s32 %s114, 2
        %s147 = sld [smem:[#allocation5 + %s146]]
        %s148 = smul.addr %s147, 16
        %s149 = scalar_lea.hbm %s1, %s148
        %s150 = scalar_lea.vmem [#allocation2], 2
        %s151 = scalar_lea.sflag [#allocation3], 2
        // Predicated region
        $region37: #{tpu_custom_call.1} parent=23 // pred_check
          _
        $region38: #{tpu_custom_call.1} parent=23 // pred_check_branch
          %153 = sbr.rel target = $region40
        $region39: #{tpu_custom_call.1} parent=23 // pred_region
          %154 = sst [smem:[#allocation12]] [#allocation17]
          %155 = sst [smem:[#allocation13]] [#allocation16]
        $region40: #{tpu_custom_call.1} parent=23 // pred_fallthru
          _
        %157 = shalt.err (0)
        %s159 = sshll.u32 %s150, 4
        %s160 = int_to_ptr.vmem [resolvable:$true] %s159
        %162 = dma.hbm_to_vmem [thread:$0]  %s149, 16, %s160, %s151
        %s163 = sadd.s32 %s114, 3
        %s164 = sld [smem:[#allocation5 + %s163]]
        %s165 = smul.addr %s164, 16
        %s166 = scalar_lea.hbm %s1, %s165
        %s167 = scalar_lea.vmem [#allocation2], 3
        %s168 = scalar_lea.sflag [#allocation3], 3
        // Predicated region
        $region41: #{tpu_custom_call.1} parent=23 // pred_check
          _
        $region42: #{tpu_custom_call.1} parent=23 // pred_check_branch
          %170 = sbr.rel target = $region44
        $region43: #{tpu_custom_call.1} parent=23 // pred_region
          %171 = sst [smem:[#allocation12]] [#allocation19]
          %172 = sst [smem:[#allocation13]] [#allocation18]
        $region44: #{tpu_custom_call.1} parent=23 // pred_fallthru
          _
        %174 = shalt.err (0)
        %s176 = sshll.u32 %s167, 4
        %s177 = int_to_ptr.vmem [resolvable:$true] %s176
        %179 = dma.hbm_to_vmem [thread:$0]  %s166, 16, %s177, %s168
        %s180 = sadd.s32 %s114, 4
        %s181 = sld [smem:[#allocation5 + %s180]]
        %s182 = smul.addr %s181, 16
        %s183 = scalar_lea.hbm %s1, %s182
        %s184 = scalar_lea.vmem [#allocation2], 4
        %s185 = scalar_lea.sflag [#allocation3], 4
        // Predicated region
        $region45: #{tpu_custom_call.1} parent=23 // pred_check
          _
        $region46: #{tpu_custom_call.1} parent=23 // pred_check_branch
          %187 = sbr.rel target = $region48
        $region47: #{tpu_custom_call.1} parent=23 // pred_region
          %188 = sst [smem:[#allocation12]] [#allocation21]
          %189 = sst [smem:[#allocation13]] [#allocation20]
        $region48: #{tpu_custom_call.1} parent=23 // pred_fallthru
          _
        %191 = shalt.err (0)
        %s193 = sshll.u32 %s184, 4
        %s194 = int_to_ptr.vmem [resolvable:$true] %s193
        %196 = dma.hbm_to_vmem [thread:$0]  %s183, 16, %s194, %s185
        %s197 = sadd.s32 %s114, 5
        %s198 = sld [smem:[#allocation5 + %s197]]
        %s199 = smul.addr %s198, 16
        %s200 = scalar_lea.hbm %s1, %s199
        %s201 = scalar_lea.vmem [#allocation2], 5
        %s202 = scalar_lea.sflag [#allocation3], 5
        // Predicated region
        $region49: #{tpu_custom_call.1} parent=23 // pred_check
          _
        $region50: #{tpu_custom_call.1} parent=23 // pred_check_branch
          %204 = sbr.rel target = $region52
        $region51: #{tpu_custom_call.1} parent=23 // pred_region
          %205 = sst [smem:[#allocation12]] [#allocation23]
          %206 = sst [smem:[#allocation13]] [#allocation22]
        $region52: #{tpu_custom_call.1} parent=23 // pred_fallthru
          _
        %208 = shalt.err (0)
        %s210 = sshll.u32 %s201, 4
        %s211 = int_to_ptr.vmem [resolvable:$true] %s210
        %213 = dma.hbm_to_vmem [thread:$0]  %s200, 16, %s211, %s202
        %s214 = sadd.s32 %s114, 6
        %s215 = sld [smem:[#allocation5 + %s214]]
        %s216 = smul.addr %s215, 16
        %s217 = scalar_lea.hbm %s1, %s216
        %s218 = scalar_lea.vmem [#allocation2], 6
        %s219 = scalar_lea.sflag [#allocation3], 6
        // Predicated region
        $region53: #{tpu_custom_call.1} parent=23 // pred_check
          _
        $region54: #{tpu_custom_call.1} parent=23 // pred_check_branch
          %221 = sbr.rel target = $region56
        $region55: #{tpu_custom_call.1} parent=23 // pred_region
          %222 = sst [smem:[#allocation12]] [#allocation25]
          %223 = sst [smem:[#allocation13]] [#allocation24]
        $region56: #{tpu_custom_call.1} parent=23 // pred_fallthru
          _
        %225 = shalt.err (0)
        %s227 = sshll.u32 %s218, 4
        %s228 = int_to_ptr.vmem [resolvable:$true] %s227
        %230 = dma.hbm_to_vmem [thread:$0]  %s217, 16, %s228, %s219
        %s231 = sadd.s32 %s114, 7
        %s232 = sld [smem:[#allocation5 + %s231]]
        %s233 = smul.addr %s232, 16
        %s234 = scalar_lea.hbm %s1, %s233
        %s235 = scalar_lea.vmem [#allocation2], 7
        %s236 = scalar_lea.sflag [#allocation3], 7
        // Predicated region
        $region57: #{tpu_custom_call.1} parent=23 // pred_check
          _
        $region58: #{tpu_custom_call.1} parent=23 // pred_check_branch
          %238 = sbr.rel target = $region60
        $region59: #{tpu_custom_call.1} parent=23 // pred_region
          %239 = sst [smem:[#allocation12]] [#allocation27]
          %240 = sst [smem:[#allocation13]] [#allocation26]
        $region60: #{tpu_custom_call.1} parent=23 // pred_fallthru
          _
        %242 = shalt.err (0)
        %s244 = sshll.u32 %s235, 4
        %s245 = int_to_ptr.vmem [resolvable:$true] %s244
        %247 = dma.hbm_to_vmem [thread:$0]  %s234, 16, %s245, %s236
        %s248 = smul.u32 1, 1
        %s249 = sshll.u32 %s248, 4
        %250 = dma.done [#allocation3], %s249
        %s251 = sshll.u32 %s248, 4
        %252 = dma.done %s134, %s251
        %s253 = sshll.u32 %s248, 4
        %254 = dma.done %s151, %s253
        %s255 = sshll.u32 %s248, 4
        %256 = dma.done %s168, %s255
        %s257 = sshll.u32 %s248, 4
        %258 = dma.done %s185, %s257
        %s259 = sshll.u32 %s248, 4
        %260 = dma.done %s202, %s259
        %s261 = sshll.u32 %s248, 4
        %262 = dma.done %s219, %s261
        %s263 = sshll.u32 %s248, 4
        %264 = dma.done %s236, %s263
        %v265 = vld [vmem:[#allocation2] sm:$0xff]
        %v266 = vld [vmem:[#allocation6] sm:$0xff]
        %v267 = vadd.f32 %v265, %v266
        %268 = vst [vmem:[%s113] sm:$0xff] %v267
        %s269 = sand.u32 %s51, 1
        %s270 = scalar_lea.sflag [#allocation8], %s269
        %s271 = sand.u32 %s51, 1
        %s272 = smul.addr %s271, 8
        %s273 = scalar_lea.vmem [#allocation9], %s272
        // Predicated region
        $region61: #{tpu_custom_call.1} parent=23 // pred_check
          %p274 = pneg %p61
        $region62: #{tpu_custom_call.1} parent=23 // pred_check_branch
          %276 = sbr.rel (%p274) target = $region64
        $region63: #{tpu_custom_call.1} parent=23 // pred_region
          %s278 = ssub.s32 128, 128
          %279 = vsyncadd %s270, %s278
          %s280 = smul.addr %s22, 128
          %s281 = scalar_lea.hbm %s3, %s280
          %s283 = sshll.u32 %s273, 4
          %s284 = int_to_ptr.vmem [resolvable:$true] %s283
          %286 = dma.vmem_to_hbm [thread:$0]  %s284, 128, %s281, %s270
        $region64: #{tpu_custom_call.1} parent=23 // pred_fallthru
          _
      $region24: #{tpu_custom_call.1} parent=5 // pred_fallthru
        _
      %p287 = scmp.le.s32.totalorder 2, %s17
      // Predicated region
      $region65: #{tpu_custom_call.1} parent=5 // pred_check
        %p288 = pneg %p287
      $region66: #{tpu_custom_call.1} parent=5 // pred_check_branch
        %290 = sbr.rel (%p288) target = $region68
      $region67: #{tpu_custom_call.1} parent=5 // pred_region
        %s291 = ssub.s32 %s17, 2
        // Predicated region
        $region69: #{tpu_custom_call.1} parent=67 // pred_check
          %p292 = pneg %p67
        $region70: #{tpu_custom_call.1} parent=67 // pred_check_branch
          %294 = sbr.rel (%p292) target = $region72
        $region71: #{tpu_custom_call.1} parent=67 // pred_region
          %s295 = sand.u32 %s52, 1
          %s296 = scalar_lea.sflag [#allocation8], %s295
          %s297 = sand.u32 %s52, 1
          %s298 = smul.addr %s297, 8
          %s299 = scalar_lea.vmem [#allocation9], %s298
          %300 = dma.done %s296, 128
        $region72: #{tpu_custom_call.1} parent=67 // pred_fallthru
          _
      $region68: #{tpu_custom_call.1} parent=5 // pred_fallthru
        _
    $region6: #{tpu_custom_call.1} parent=1 // loop_footer
      %s21 = sadd.s32 1, %s17
    $region7: #{tpu_custom_call.1} parent=1 // loop_footer_branch
      %16 = sbr.rel target = $region3
    $region8: #{tpu_custom_call.1} parent=1 // loop_exit
      _
    %301 = vsyncpa [#allocation7], 1
    %s302 = scalar_lea.sflag [#allocation7], 1
    %303 = vsyncpa %s302, 1
    %304 = vsyncpa [#allocation8], 1
    %s305 = scalar_lea.sflag [#allocation8], 1
    %306 = vsyncpa %s305, 1
  %307 = vsyncmov [#allocation3]
  %s308 = vpop.sfrf %307
  %p309 = scmp.eq.s32.totalorder %s308, 0
  %p310 = pneg %p309
  %312 = shalt.err (%p310)
  %s313 = scalar_lea.sflag [#allocation3], 1
  %314 = vsyncmov %s313
  %s315 = vpop.sfrf %314
  %p316 = scmp.eq.s32.totalorder %s315, 0
  %p317 = pneg %p316
  %319 = shalt.err (%p317)
  %s320 = scalar_lea.sflag [#allocation3], 2
  %321 = vsyncmov %s320
  %s322 = vpop.sfrf %321
  %p323 = scmp.eq.s32.totalorder %s322, 0
  %p324 = pneg %p323
  %326 = shalt.err (%p324)
  %s327 = scalar_lea.sflag [#allocation3], 3
  %328 = vsyncmov %s327
  %s329 = vpop.sfrf %328
  %p330 = scmp.eq.s32.totalorder %s329, 0
  %p331 = pneg %p330
  %333 = shalt.err (%p331)
  %s334 = scalar_lea.sflag [#allocation3], 4
  %335 = vsyncmov %s334
  %s336 = vpop.sfrf %335
  %p337 = scmp.eq.s32.totalorder %s336, 0
  %p338 = pneg %p337
  %340 = shalt.err (%p338)
  %s341 = scalar_lea.sflag [#allocation3], 5
  %342 = vsyncmov %s341
  %s343 = vpop.sfrf %342
  %p344 = scmp.eq.s32.totalorder %s343, 0
  %p345 = pneg %p344
  %347 = shalt.err (%p345)
  %s348 = scalar_lea.sflag [#allocation3], 6
  %349 = vsyncmov %s348
  %s350 = vpop.sfrf %349
  %p351 = scmp.eq.s32.totalorder %s350, 0
  %p352 = pneg %p351
  %354 = shalt.err (%p352)
  %s355 = scalar_lea.sflag [#allocation3], 7
  %356 = vsyncmov %s355
  %s357 = vpop.sfrf %356
  %p358 = scmp.eq.s32.totalorder %s357, 0
  %p359 = pneg %p358
  %361 = shalt.err (%p359)

</llo_original>
